<compile_context>
chip_gen: v7x
topology: tpu7x:2x2x1
jax: 0.10.0
libtpu: 0.0.40
codegen_flags: <defaults>
</compile_context>

<pallas_src>
import jax
import jax.numpy as jnp
from jax.experimental import pallas as pl
from jax.experimental.pallas import tpu as pltpu

C_IN = 64
C_MID = 64
C_OUT = 1
LANE = 128
TN_CAP = 2048  # (64, 2048) f32 tile = 512 KiB; ~1 MiB double-buffered — fits v5e/v6e/v7x easily


def _detection_branch_kernel(x_ref, w1_ref, b1_ref, w2_ref, b2_ref, o_ref):
    # x_ref:  (64, tn)  input channels on sublanes, pixels on lanes
    # w1_ref: (64, 64)  BN-folded conv1 weight, (out, in)
    # b1_ref: (64, 1)   BN-folded conv1 bias (sublane-broadcast column)
    # w2_ref: (1, 64)   conv2 weight, (out, in)
    # b2_ref: (1,)      conv2 bias, SMEM scalar
    # o_ref:  (1, tn)   lane-dense output tile
    x = x_ref[...].astype(jnp.float32)
    h = jnp.dot(w1_ref[...], x, preferred_element_type=jnp.float32) + b1_ref[...]
    h = jnp.maximum(h, 0.0)
    o = jnp.dot(w2_ref[...], h, preferred_element_type=jnp.float32) + b2_ref[0]
    o_ref[...] = o.astype(o_ref.dtype)


def detection_branch(x_nchw, params):
    """x_nchw: (N, 64, H, W) float32. Returns (N, 1, H, W) float32."""
    eps = 1e-5
    bn_scale = params["gamma"] / jnp.sqrt(params["run_var"] + eps)   # (64,)
    bn_shift = params["beta"] - params["run_mean"] * bn_scale        # (64,)

    # Fold BatchNorm into conv1:  (W1 x + b1) * s + t  ==  (s*W1) x + (s*b1 + t)
    w1_f = (params["w1"] * bn_scale[:, None]).astype(jnp.float32)            # (64, 64) (out, in)
    b1_f = (params["b1"] * bn_scale + bn_shift).reshape(C_MID, 1).astype(jnp.float32)
    w2_k = params["w2"].reshape(C_OUT, C_MID).astype(jnp.float32)            # (1, 64)  (out, in)
    b2_k = params["b2"].reshape(C_OUT).astype(jnp.float32)                   # (1,)

    N, C, H, W = x_nchw.shape
    assert C == C_IN
    hw = H * W

    # Channels-on-sublanes view: (N, 64, H*W). No data movement (pure reshape).
    x3 = x_nchw.reshape(N, C_IN, hw)

    # Pixel-tile size: multiple of 128 lanes, capped. If N == 1, prefer >= 2
    # pixel tiles so a 2-TC chip (v7x) can shard the grid across cores.
    hw_r = ((hw + LANE - 1) // LANE) * LANE
    cap = TN_CAP
    if N == 1 and hw_r > LANE:
        cap = min(cap, ((hw_r // 2 + LANE - 1) // LANE) * LANE)
    tn = min(cap, hw_r)
    hw_padded = ((hw + tn - 1) // tn) * tn
    if hw_padded != hw:
        x3 = jnp.pad(x3, ((0, 0), (0, 0), (0, hw_padded - hw)))

    grid = (N, hw_padded // tn)

    out = pl.pallas_call(
        _detection_branch_kernel,
        out_shape=jax.ShapeDtypeStruct((N, C_OUT, hw_padded), x_nchw.dtype),
        grid_spec=pltpu.PrefetchScalarGridSpec(
            num_scalar_prefetch=0,
            grid=grid,
            in_specs=[
                pl.BlockSpec((None, C_IN, tn), lambda n, j: (n, 0, j)),   # x tile (batch dim squeezed)
                pl.BlockSpec((C_MID, C_IN), lambda n, j: (0, 0)),         # W1 (BN-folded)
                pl.BlockSpec((C_MID, 1), lambda n, j: (0, 0)),            # b1 (BN-folded)
                pl.BlockSpec((C_OUT, C_MID), lambda n, j: (0, 0)),        # W2
                pl.BlockSpec(memory_space=pltpu.MemorySpace.SMEM),        # b2 scalar in SMEM
            ],
            out_specs=pl.BlockSpec((None, C_OUT, tn), lambda n, j: (n, 0, j)),
        ),
        compiler_params=pltpu.CompilerParams(
            dimension_semantics=("parallel", "parallel")),
    )(x3, w1_f, b1_f, w2_k, b2_k)

    out = out[:, :, :hw]                     # strip pixel padding (no-op if none)
    return out.reshape(N, C_OUT, H, W)       # already NCHW — no output transpose


def _init_params(key):
    """Deterministic synthetic parameters matching the PyTorch module shapes
    (weights stored in torch (out, in) orientation)."""
    ks = jax.random.split(key, 8)
    w1 = jax.random.normal(ks[0], (C_MID, C_IN), jnp.float32) * 0.05     # Conv2d(64,64,1) weight
    b1 = jax.random.normal(ks[1], (C_MID,), jnp.float32) * 0.05
    gamma = 1.0 + 0.1 * jax.random.normal(ks[2], (C_MID,), jnp.float32)  # BatchNorm2d(64)
    beta = 0.1 * jax.random.normal(ks[3], (C_MID,), jnp.float32)
    run_mean = 0.1 * jax.random.normal(ks[4], (C_MID,), jnp.float32)
    run_var = jnp.abs(1.0 + 0.1 * jax.random.normal(ks[5], (C_MID,), jnp.float32))
    w2 = jax.random.normal(ks[6], (C_OUT, C_MID), jnp.float32) * 0.05    # Conv2d(64,1,1) weight
    b2 = jax.random.normal(ks[7], (C_OUT,), jnp.float32) * 0.05
    return {
        "w1": w1, "b1": b1,
        "gamma": gamma, "beta": beta, "run_mean": run_mean, "run_var": run_var,
        "w2": w2, "b2": b2,
    }


def _reference(x_nchw, params):
    """Pure-JAX reference of the same forward (eval-mode BN)."""
    eps = 1e-5
    scale = params["gamma"] / jnp.sqrt(params["run_var"] + eps)
    shift = params["beta"] - params["run_mean"] * scale
    N, C, H, W = x_nchw.shape
    x = jnp.transpose(x_nchw, (0, 2, 3, 1)).reshape(-1, C)
    h = x @ params["w1"].T + params["b1"]
    h = jnp.maximum(h * scale + shift, 0.0)
    o = h @ params["w2"].T + params["b2"]
    return jnp.transpose(o.reshape(N, H, W, C_OUT), (0, 3, 1, 2))


if __name__ == "__main__":
    key = jax.random.PRNGKey(0)
    k_x, k_p = jax.random.split(key)

    # Module requires 64 input channels; small spatial size for the smoke test.
    N, H, W = 2, 16, 16
    x = jax.random.normal(k_x, (N, C_IN, H, W), jnp.float32)
    params = _init_params(k_p)

    out = jax.block_until_ready(detection_branch(x, params))
    ref = _reference(x, params)

    assert out.shape == (N, 1, H, W), out.shape
    assert jnp.allclose(out, ref, atol=1e-4, rtol=1e-4), "mismatch vs reference"

    print("KERNEL_OK")
</pallas_src>

<mosaic_0001>
module attributes {stable_mosaic.version = 11 : i64} {
  func.func @_detection_branch_kernel(%arg0: i32, %arg1: i32, %arg2: memref<1x64x256xf32, #tpu.memory_space<vmem>>, %arg3: memref<64x64xf32, #tpu.memory_space<vmem>>, %arg4: memref<64x1xf32, #tpu.memory_space<vmem>>, %arg5: memref<1x64xf32, #tpu.memory_space<vmem>>, %arg6: memref<1xf32, #tpu.memory_space<smem>>, %arg7: memref<1x1x256xf32, #tpu.memory_space<vmem>>) attributes {dimension_semantics = [#tpu.dimension_semantics<parallel>, #tpu.dimension_semantics<parallel>], iteration_bounds = array<i64: 2, 1>, scalar_prefetch = 0 : i64, scratch_operands = 0 : i64, tpu.core_type = #tpu.core_type<tc>, window_params = [{transform_indices = @transform_0, window_bounds = array<i64: 1, 64, 256>}, {pipeline_mode = #tpu.pipeline_mode<synchronous>, transform_indices = @transform_1, window_bounds = array<i64: 64, 64>}, {pipeline_mode = #tpu.pipeline_mode<synchronous>, transform_indices = @transform_2, window_bounds = array<i64: 64, 1>}, {pipeline_mode = #tpu.pipeline_mode<synchronous>, transform_indices = @transform_3, window_bounds = array<i64: 1, 64>}, {transform_indices = @transform_4, window_bounds = array<i64: 1>}, {transform_indices = @transform_5, window_bounds = array<i64: 1, 1, 256>}]} {
    %c0 = arith.constant 0 : index
    %c0_0 = arith.constant 0 : index
    %c0_1 = arith.constant 0 : index
    %0 = vector.load %arg2[%c0, %c0_0, %c0_1] : memref<1x64x256xf32, #tpu.memory_space<vmem>>, vector<1x64x256xf32>
    %1 = vector.shape_cast %0 : vector<1x64x256xf32> to vector<64x256xf32>
    %c0_2 = arith.constant 0 : index
    %c0_3 = arith.constant 0 : index
    %2 = vector.load %arg3[%c0_2, %c0_3] : memref<64x64xf32, #tpu.memory_space<vmem>>, vector<64x64xf32>
    %cst = arith.constant dense<0.000000e+00> : vector<64x256xf32>
    %3 = tpu.matmul %2, %1, %cst {dimension_numbers = #tpu.dot_dimension_numbers<[1], [0], [0], [1], [0, 0, 1, 1], [], []>} : vector<64x64xf32>, vector<64x256xf32>, vector<64x256xf32> -> vector<64x256xf32>
    %c0_4 = arith.constant 0 : index
    %c0_5 = arith.constant 0 : index
    %4 = vector.load %arg4[%c0_4, %c0_5] : memref<64x1xf32, #tpu.memory_space<vmem>>, vector<64x1xf32>
    %5 = vector.broadcast %4 : vector<64x1xf32> to vector<64x256xf32>
    %6 = arith.addf %3, %5 : vector<64x256xf32>
    %cst_6 = arith.constant 0.000000e+00 : f32
    %7 = vector.broadcast %cst_6 : f32 to vector<64x256xf32>
    %8 = arith.maximumf %6, %7 : vector<64x256xf32>
    %c0_7 = arith.constant 0 : index
    %c0_8 = arith.constant 0 : index
    %9 = vector.load %arg5[%c0_7, %c0_8] : memref<1x64xf32, #tpu.memory_space<vmem>>, vector<1x64xf32>
    %cst_9 = arith.constant dense<0.000000e+00> : vector<1x256xf32>
    %10 = tpu.matmul %9, %8, %cst_9 {dimension_numbers = #tpu.dot_dimension_numbers<[1], [0], [0], [1], [0, 0, 1, 1], [], []>} : vector<1x64xf32>, vector<64x256xf32>, vector<1x256xf32> -> vector<1x256xf32>
    %c0_10 = arith.constant 0 : index
    %11 = memref.load %arg6[%c0_10] : memref<1xf32, #tpu.memory_space<smem>>
    %12 = vector.broadcast %11 : f32 to vector<1x256xf32>
    %13 = arith.addf %10, %12 : vector<1x256xf32>
    %c0_11 = arith.constant 0 : index
    %c0_12 = arith.constant 0 : index
    %c0_13 = arith.constant 0 : index
    %14 = vector.load %arg7[%c0_11, %c0_12, %c0_13] : memref<1x1x256xf32, #tpu.memory_space<vmem>>, vector<1x1x256xf32>
    %15 = vector.shape_cast %14 : vector<1x1x256xf32> to vector<1x256xf32>
    %16 = vector.shape_cast %13 : vector<1x256xf32> to vector<1x1x256xf32>
    tpu.vector_store %arg7[%c0_11, %c0_12, %c0_13], %16 {strides = array<i32>} : memref<1x1x256xf32, #tpu.memory_space<vmem>>, vector<1x1x256xf32>,
    return
  }
  func.func @transform_0(%arg0: i32, %arg1: i32) -> (i32, i32, i32) {
    %c0_i32 = arith.constant 0 : i32
    %c0_i32_0 = arith.constant 0 : i32
    return %arg0, %c0_i32, %arg1 : i32, i32, i32
  }
  func.func @transform_1(%arg0: i32, %arg1: i32) -> (i32, i32) {
    %c0_i32 = arith.constant 0 : i32
    %c0_i32_0 = arith.constant 0 : i32
    %c0_i32_1 = arith.constant 0 : i32
    return %c0_i32, %c0_i32_0 : i32, i32
  }
  func.func @transform_2(%arg0: i32, %arg1: i32) -> (i32, i32) {
    %c0_i32 = arith.constant 0 : i32
    %c0_i32_0 = arith.constant 0 : i32
    %c0_i32_1 = arith.constant 0 : i32
    return %c0_i32, %c0_i32_0 : i32, i32
  }
  func.func @transform_3(%arg0: i32, %arg1: i32) -> (i32, i32) {
    %c0_i32 = arith.constant 0 : i32
    %c0_i32_0 = arith.constant 0 : i32
    %c0_i32_1 = arith.constant 0 : i32
    return %c0_i32, %c0_i32_0 : i32, i32
  }
  func.func @transform_4(%arg0: i32, %arg1: i32) -> i32 {
    %c0_i32 = arith.constant 0 : i32
    %c0_i32_0 = arith.constant 0 : i32
    return %c0_i32 : i32
  }
  func.func @transform_5(%arg0: i32, %arg1: i32) -> (i32, i32, i32) {
    %c0_i32 = arith.constant 0 : i32
    %c0_i32_0 = arith.constant 0 : i32
    return %arg0, %c0_i32, %arg1 : i32, i32, i32
  }
}

</mosaic_0001>

<llo_original>
// kernel: tpu_custom_call.1
$region0: #{tpu_custom_call.1}
  #allocation0 [shape = 'u32[]', space=smem, size = 0x4, offset = 0x4, fixed_abs, tag = 'smem constant byte address 0x4 - core index']
  #allocation1 [shape = 'u32[144,128]{1,0:T(1,128)}', space=vmem, size = 0x12000, scoped, tag = 'internal scratch']
  #allocation2 [shape = 'f32[1]{0:T(128)S(6)}', space=smem, size = 0x200, scoped, tag = 'scoped memory for tpu_custom_call.1']
  %s0 = inlined_call_operand.hbm [shape: f32[2,64,256], index: 0, kind: input, shape index: {}]
  %s1 = inlined_call_operand.vmem [shape: f32[64,64], index: 1, kind: input, shape index: {}]
  %s2 = inlined_call_operand.vmem [shape: f32[64,1], index: 2, kind: input, shape index: {}]
  %s3 = inlined_call_operand.vmem [shape: f32[1,64], index: 3, kind: input, shape index: {}]
  %s4 = inlined_call_operand.<no memory space> [shape: f32[1], index: 4, kind: input, shape index: {}]
  %s5 = inlined_call_operand.hbm [shape: f32[2,1,256], index: 5, kind: output, shape index: {}]
  %s6 = sld [smem:[#allocation0]]
  $region57: #{tpu_custom_call.1} parent=0
    _
  %s8 = ssub.s32 1, %s6
  %s9 = scalar_select 0, %s8, %s6
  %10 = sst [smem:[#allocation2]] %s4
  $region1: #{tpu_custom_call.1} parent=0
    #allocation3 [shape = 'u8[131072]{0}', space=vmem, size = 0x20000, scoped, tag = 'input window, operand 0']
    #allocation4 [shape = 's32[2]{0}', space=sflag, size = 0x8, scoped, tag = 'scoped memory for tpu_custom_call.1']
    #allocation5 [shape = 's32[2]{0}', space=sflag, size = 0x8, scoped, tag = 'scoped memory for tpu_custom_call.1']
    #allocation6 [shape = 'u8[2048]{0}', space=vmem, size = 0x800, scoped, tag = 'output window, operand 0']
    %11 = vsyncpa [#allocation4], 0
    %s12 = scalar_lea.sflag [#allocation4], 1
    %13 = vsyncpa %s12, 0
    %14 = vsyncpa [#allocation5], 0
    %s15 = scalar_lea.sflag [#allocation5], 1
    %16 = vsyncpa %s15, 0
    loop: start=0, step=1, limit=4
    $region2: #{tpu_custom_call.1} parent=1 // loop_pre_header
      _
    $region3: #{tpu_custom_call.1} parent=1 // loop_header
      %s18 = sphi 0, %s22
      %p19 = scmp.ge.s32.totalorder %s18, 4
      %s25 = sphi 0, %s37
      %s26 = sphi 0, %s33
      %s27 = sphi 0, %s25
      %s28 = sphi 0, %s26
      %s29 = sphi 0, %s27
      %s30 = sphi 0, %s28
      %s42 = sphi 0, %s44
      %s45 = sphi 0, %s42
      %s46 = sphi 0, %s45
      %s62 = sphi 0, %s46
      %s66 = sphi 0, %s66
      %s68 = sphi 0, %s66
      %s69 = sphi 0, %s68
      %s83 = sphi 0, %s69
      %s87 = sphi 0, %s87
      %s89 = sphi 0, %s87
      %s90 = sphi 0, %s89
      %s104 = sphi 0, %s90
      %s108 = sphi 0, %s108
      %s110 = sphi 0, %s108
      %s111 = sphi 0, %s110
      %s125 = sphi 0, %s111
      %s129 = sphi 0, %s129
      %s131 = sphi 0, %s129
      %s132 = sphi 0, %s131
      %s146 = sphi 0, %s132
      %s154 = sphi 0, %s156
      %s157 = sphi 0, %s154
      %s158 = sphi 0, %s157
      %s174 = sphi 0, %s158
    $region4: #{tpu_custom_call.1} parent=1 // loop_header_branch
      %21 = sbr.rel (%p19) target = $region8
    $region5: #{tpu_custom_call.1} parent=1 // loop_body
      %s23 = ssub.s32 %s18, 1
      %s24 = ssub.s32 %s18, 2
      %s31 = sadd.s32 1, %s26
      %p32 = scmp.ge.s32.totalorder %s31, 1
      %s33 = scalar_select %p32, 0, %s31
      %s34 = sadd.s32 1, %s25
      %s35 = scalar_select %p32, %s34, %s25
      %p36 = scmp.ge.s32.totalorder %s35, 2
      %s37 = scalar_select %p36, 0, %s35
      %s38 = ssub.s32 %s25, %s37
      %s39 = ssub.s32 %s26, %s33
      %s40 = sor.u32 %s38, %s39
      %p41 = scmp.eq.s32.totalorder %s40, 0
      %s43 = sadd.s32 %s42, 1
      %s44 = scalar_select %p41, %s42, %s43
      %p47 = pneg %p41
      %p48 = scmp.eq.s32.totalorder %s18, 1
      %p49 = por %p47, %p48
      %p50 = scmp.ne.s32.totalorder %s42, %s45
      %p51 = scmp.eq.s32.totalorder %s18, 0
      %p52 = por %p50, %p51
      %p53 = scmp.ne.s32.totalorder %s42, %s45
      %p54 = scmp.eq.s32.totalorder %s23, 1
      %p55 = por %p53, %p54
      %p56 = scmp.ne.s32.totalorder %s45, %s46
      %p57 = scmp.eq.s32.totalorder %s23, 0
      %p58 = por %p56, %p57
      %p59 = scmp.ne.s32.totalorder %s45, %s46
      %p60 = scmp.eq.s32.totalorder %s24, 1
      %p61 = por %p59, %p60
      %p63 = scmp.ne.s32.totalorder %s46, %s62
      %p64 = scmp.eq.s32.totalorder %s24, 0
      %p65 = por %p63, %p64
      %s67 = sadd.s32 %s66, 1
      %p70 = scmp.eq.s32.totalorder %s18, 1
      %p71 = scmp.ne.s32.totalorder %s66, %s68
      %p72 = scmp.eq.s32.totalorder %s18, 0
      %p73 = por %p71, %p72
      %p74 = scmp.ne.s32.totalorder %s66, %s68
      %p75 = scmp.eq.s32.totalorder %s23, 1
      %p76 = por %p74, %p75
      %p77 = scmp.ne.s32.totalorder %s68, %s69
      %p78 = scmp.eq.s32.totalorder %s23, 0
      %p79 = por %p77, %p78
      %p80 = scmp.ne.s32.totalorder %s68, %s69
      %p81 = scmp.eq.s32.totalorder %s24, 1
      %p82 = por %p80, %p81
      %p84 = scmp.ne.s32.totalorder %s69, %s83
      %p85 = scmp.eq.s32.totalorder %s24, 0
      %p86 = por %p84, %p85
      %s88 = sadd.s32 %s87, 1
      %p91 = scmp.eq.s32.totalorder %s18, 1
      %p92 = scmp.ne.s32.totalorder %s87, %s89
      %p93 = scmp.eq.s32.totalorder %s18, 0
      %p94 = por %p92, %p93
      %p95 = scmp.ne.s32.totalorder %s87, %s89
      %p96 = scmp.eq.s32.totalorder %s23, 1
      %p97 = por %p95, %p96
      %p98 = scmp.ne.s32.totalorder %s89, %s90
      %p99 = scmp.eq.s32.totalorder %s23, 0
      %p100 = por %p98, %p99
      %p101 = scmp.ne.s32.totalorder %s89, %s90
      %p102 = scmp.eq.s32.totalorder %s24, 1
      %p103 = por %p101, %p102
      %p105 = scmp.ne.s32.totalorder %s90, %s104
      %p106 = scmp.eq.s32.totalorder %s24, 0
      %p107 = por %p105, %p106
      %s109 = sadd.s32 %s108, 1
      %p112 = scmp.eq.s32.totalorder %s18, 1
      %p113 = scmp.ne.s32.totalorder %s108, %s110
      %p114 = scmp.eq.s32.totalorder %s18, 0
      %p115 = por %p113, %p114
      %p116 = scmp.ne.s32.totalorder %s108, %s110
      %p117 = scmp.eq.s32.totalorder %s23, 1
      %p118 = por %p116, %p117
      %p119 = scmp.ne.s32.totalorder %s110, %s111
      %p120 = scmp.eq.s32.totalorder %s23, 0
      %p121 = por %p119, %p120
      %p122 = scmp.ne.s32.totalorder %s110, %s111
      %p123 = scmp.eq.s32.totalorder %s24, 1
      %p124 = por %p122, %p123
      %p126 = scmp.ne.s32.totalorder %s111, %s125
      %p127 = scmp.eq.s32.totalorder %s24, 0
      %p128 = por %p126, %p127
      %s130 = sadd.s32 %s129, 1
      %p133 = scmp.eq.s32.totalorder %s18, 1
      %p134 = scmp.ne.s32.totalorder %s129, %s131
      %p135 = scmp.eq.s32.totalorder %s18, 0
      %p136 = por %p134, %p135
      %p137 = scmp.ne.s32.totalorder %s129, %s131
      %p138 = scmp.eq.s32.totalorder %s23, 1
      %p139 = por %p137, %p138
      %p140 = scmp.ne.s32.totalorder %s131, %s132
      %p141 = scmp.eq.s32.totalorder %s23, 0
      %p142 = por %p140, %p141
      %p143 = scmp.ne.s32.totalorder %s131, %s132
      %p144 = scmp.eq.s32.totalorder %s24, 1
      %p145 = por %p143, %p144
      %p147 = scmp.ne.s32.totalorder %s132, %s146
      %p148 = scmp.eq.s32.totalorder %s24, 0
      %p149 = por %p147, %p148
      %s150 = ssub.s32 %s25, %s37
      %s151 = ssub.s32 %s26, %s33
      %s152 = sor.u32 %s150, %s151
      %p153 = scmp.eq.s32.totalorder %s152, 0
      %s155 = sadd.s32 %s154, 1
      %s156 = scalar_select %p153, %s154, %s155
      %p159 = pneg %p153
      %p160 = scmp.eq.s32.totalorder %s18, 1
      %p161 = por %p159, %p160
      %p162 = scmp.ne.s32.totalorder %s154, %s157
      %p163 = scmp.eq.s32.totalorder %s18, 0
      %p164 = por %p162, %p163
      %p165 = scmp.ne.s32.totalorder %s154, %s157
      %p166 = scmp.eq.s32.totalorder %s23, 1
      %p167 = por %p165, %p166
      %p168 = scmp.ne.s32.totalorder %s157, %s158
      %p169 = scmp.eq.s32.totalorder %s23, 0
      %p170 = por %p168, %p169
      %p171 = scmp.ne.s32.totalorder %s157, %s158
      %p172 = scmp.eq.s32.totalorder %s24, 1
      %p173 = por %p171, %p172
      %p175 = scmp.ne.s32.totalorder %s158, %s174
      %p176 = scmp.eq.s32.totalorder %s24, 0
      %p177 = por %p175, %p176
      %p178 = scmp.le.s32.totalorder 1, %s18
      %p179 = scmp.lt.s32.totalorder %s18, 3
      %p180 = pnand %p178, %p179
      %p181 = pneg %p180
      // Predicated region
      $region9: #{tpu_custom_call.1} parent=5 // pred_check
        _
      $region10: #{tpu_custom_call.1} parent=5 // pred_check_branch
        %183 = sbr.rel (%p180) target = $region12
      $region11: #{tpu_custom_call.1} parent=5 // pred_region
        %s184 = ssub.s32 %s18, 1
        // Predicated region
        $region13: #{tpu_custom_call.1} parent=11 // pred_check
          %p185 = pneg %p79
        $region14: #{tpu_custom_call.1} parent=11 // pred_check_branch
          %187 = sbr.rel (%p185) target = $region16
        $region15: #{tpu_custom_call.1} parent=11 // pred_region
          _
        $region16: #{tpu_custom_call.1} parent=11 // pred_fallthru
          _
        // Predicated region
        $region17: #{tpu_custom_call.1} parent=11 // pred_check
          %p188 = pneg %p100
        $region18: #{tpu_custom_call.1} parent=11 // pred_check_branch
          %190 = sbr.rel (%p188) target = $region20
        $region19: #{tpu_custom_call.1} parent=11 // pred_region
          _
        $region20: #{tpu_custom_call.1} parent=11 // pred_fallthru
          _
        // Predicated region
        $region21: #{tpu_custom_call.1} parent=11 // pred_check
          %p191 = pneg %p121
        $region22: #{tpu_custom_call.1} parent=11 // pred_check_branch
          %193 = sbr.rel (%p191) target = $region24
        $region23: #{tpu_custom_call.1} parent=11 // pred_region
          _
        $region24: #{tpu_custom_call.1} parent=11 // pred_fallthru
          _
        // Predicated region
        $region25: #{tpu_custom_call.1} parent=11 // pred_check
          %p194 = pneg %p142
        $region26: #{tpu_custom_call.1} parent=11 // pred_check_branch
          %196 = sbr.rel (%p194) target = $region28
        $region27: #{tpu_custom_call.1} parent=11 // pred_region
          _
        $region28: #{tpu_custom_call.1} parent=11 // pred_fallthru
          _
      $region12: #{tpu_custom_call.1} parent=5 // pred_fallthru
        _
      %p197 = scmp.lt.s32.totalorder %s18, 2
      // Predicated region
      $region29: #{tpu_custom_call.1} parent=5 // pred_check
        %p198 = pneg %p197
      $region30: #{tpu_custom_call.1} parent=5 // pred_check_branch
        %200 = sbr.rel (%p198) target = $region32
      $region31: #{tpu_custom_call.1} parent=5 // pred_region
        // Predicated region
        $region33: #{tpu_custom_call.1} parent=31 // pred_check
          %p201 = pneg %p52
        $region34: #{tpu_custom_call.1} parent=31 // pred_check_branch
          %203 = sbr.rel (%p201) target = $region36
        $region35: #{tpu_custom_call.1} parent=31 // pred_region
          %s204 = sand.u32 %s42, 1
          %s205 = scalar_lea.sflag [#allocation4], %s204
          %s206 = sand.u32 %s42, 1
          %s207 = smul.addr %s206, 128
          %s208 = scalar_lea.vmem [#allocation3], %s207
          %s209 = smul.u32 2, %s26
          %s211 = ssub.s32 2048, 2048
          %212 = vsyncadd %s205, %s211
          %s213 = smul.addr %s25, 16
          %s214 = sadd.s32 %s209, %s213
          %s215 = smul.addr %s214, 128
          %s216 = scalar_lea.hbm %s0, %s215
          %s217 = sshll.u32 %s208, 4
          %s218 = int_to_ptr.vmem [resolvable:$true] %s217
          %223 = dma.hbm_to_vmem [thread:$0]  %s216, 2048, %s218, %s205, 256, 256, 16
        $region36: #{tpu_custom_call.1} parent=31 // pred_fallthru
          _
      $region32: #{tpu_custom_call.1} parent=5 // pred_fallthru
        _
      %p224 = scmp.le.s32.totalorder 1, %s18
      %p225 = scmp.lt.s32.totalorder %s18, 3
      %p226 = pnand %p224, %p225
      %p227 = pneg %p226
      // Predicated region
      $region37: #{tpu_custom_call.1} parent=5 // pred_check
        _
      $region38: #{tpu_custom_call.1} parent=5 // pred_check_branch
        %229 = sbr.rel (%p226) target = $region40
      $region39: #{tpu_custom_call.1} parent=5 // pred_region
        %s230 = ssub.s32 %s18, 1
        %s231 = sand.u32 %s45, 1
        %s232 = scalar_lea.sflag [#allocation4], %s231
        %s233 = sand.u32 %s45, 1
        %s234 = smul.addr %s233, 128
        %s235 = scalar_lea.vmem [#allocation3], %s234
        // Predicated region
        $region41: #{tpu_custom_call.1} parent=39 // pred_check
          %p236 = pneg %p58
        $region42: #{tpu_custom_call.1} parent=39 // pred_check_branch
          %238 = sbr.rel (%p236) target = $region44
        $region43: #{tpu_custom_call.1} parent=39 // pred_region
          %239 = dma.done %s232, 2048
        $region44: #{tpu_custom_call.1} parent=39 // pred_fallthru
          _
        %s240 = sand.u32 %s45, 1
        %s241 = scalar_lea.sflag [#allocation4], %s240
        %s242 = sand.u32 %s45, 1
        %s243 = smul.addr %s242, 128
        %s244 = scalar_lea.vmem [#allocation3], %s243
        %p245 = pneg %p58
        %p246 = pneg %p55
        %p247 = pneg %p79
        %p248 = pneg %p76
        %p249 = pneg %p100
        %p250 = pneg %p97
        %p251 = pneg %p121
        %p252 = pneg %p118
        %p253 = pneg %p142
        %p254 = pneg %p139
        %p255 = pneg %p170
        %p256 = pneg %p167
        %s257 = sand.u32 %s157, 1
        %s258 = scalar_lea.sflag [#allocation5], %s257
        %s259 = sand.u32 %s157, 1
        %s260 = smul.addr %s259, 2
        %s261 = scalar_lea.vmem [#allocation6], %s260
        %s262 = smul.u32 2, %s28
        %s263 = smul.u32 2, %s28
        %v264 = vld [vmem:[%s235] sm:$0xff]
        %v265 = vld [vmem:[%s235 + $0x8] sm:$0xff]
        %v266 = vld [vmem:[%s235 + $0x10] sm:$0xff]
        %v267 = vld [vmem:[%s235 + $0x18] sm:$0xff]
        %v268 = vld [vmem:[%s235 + $0x20] sm:$0xff]
        %v269 = vld [vmem:[%s235 + $0x28] sm:$0xff]
        %v270 = vld [vmem:[%s235 + $0x30] sm:$0xff]
        %v271 = vld [vmem:[%s235 + $0x38] sm:$0xff]
        %v272 = vld [vmem:[%s235 + $0x40] sm:$0xff]
        %v273 = vld [vmem:[%s235 + $0x48] sm:$0xff]
        %v274 = vld [vmem:[%s235 + $0x50] sm:$0xff]
        %v275 = vld [vmem:[%s235 + $0x58] sm:$0xff]
        %v276 = vld [vmem:[%s235 + $0x60] sm:$0xff]
        %v277 = vld [vmem:[%s235 + $0x68] sm:$0xff]
        %v278 = vld [vmem:[%s235 + $0x70] sm:$0xff]
        %v279 = vld [vmem:[%s235 + $0x78] sm:$0xff]
        %v280 = vld [vmem:[%s1] sm:$0xff]
        %v281 = vld [vmem:[%s1 + $0x8] sm:$0xff]
        %v282 = vld [vmem:[%s1 + $0x10] sm:$0xff]
        %v283 = vld [vmem:[%s1 + $0x18] sm:$0xff]
        %v284 = vld [vmem:[%s1 + $0x20] sm:$0xff]
        %v285 = vld [vmem:[%s1 + $0x28] sm:$0xff]
        %v286 = vld [vmem:[%s1 + $0x30] sm:$0xff]
        %v287 = vld [vmem:[%s1 + $0x38] sm:$0xff]
        %v288 = vld [vmem:[%s2] sm:$0xff]
        %v289 = vld [vmem:[%s2 + $0x8] sm:$0xff]
        %v290 = vld [vmem:[%s2 + $0x10] sm:$0xff]
        %v291 = vld [vmem:[%s2 + $0x18] sm:$0xff]
        %v292 = vld [vmem:[%s2 + $0x20] sm:$0xff]
        %v293 = vld [vmem:[%s2 + $0x28] sm:$0xff]
        %v294 = vld [vmem:[%s2 + $0x30] sm:$0xff]
        %v295 = vld [vmem:[%s2 + $0x38] sm:$0xff]
        %297 = vset.pattern.permute.xlu0 0
        %298 = vperm.xlu0 %297, %v288
        %v299 = vpop.permute.xlu0 %298
        %302 = vset.pattern.permute.xlu0 0
        %303 = vperm.xlu0 %302, %v289
        %v304 = vpop.permute.xlu0 %303
        %307 = vset.pattern.permute.xlu0 0
        %308 = vperm.xlu0 %307, %v290
        %v309 = vpop.permute.xlu0 %308
        %312 = vset.pattern.permute.xlu0 0
        %313 = vperm.xlu0 %312, %v291
        %v314 = vpop.permute.xlu0 %313
        %317 = vset.pattern.permute.xlu0 0
        %318 = vperm.xlu0 %317, %v292
        %v319 = vpop.permute.xlu0 %318
        %322 = vset.pattern.permute.xlu0 0
        %323 = vperm.xlu0 %322, %v293
        %v324 = vpop.permute.xlu0 %323
        %327 = vset.pattern.permute.xlu0 0
        %328 = vperm.xlu0 %327, %v294
        %v329 = vpop.permute.xlu0 %328
        %332 = vset.pattern.permute.xlu0 0
        %333 = vperm.xlu0 %332, %v295
        %v334 = vpop.permute.xlu0 %333
        %vm336 = vcmask 523264
        %v338 = vsel %vm336, %v280, 0
        %v341 = vsel %vm336, %v281, 0
        %v344 = vsel %vm336, %v282, 0
        %v347 = vsel %vm336, %v283, 0
        %v350 = vsel %vm336, %v284, 0
        %v353 = vsel %vm336, %v285, 0
        %v356 = vsel %vm336, %v286, 0
        %v359 = vsel %vm336, %v287, 0
        %361 = vmatprep.subr.mxu0 %v265
        %362 = vmatpush1.msra.mxu0 %v264
        %363 = vmatprep.subr.mxu0 %v267
        %364 = vmatpush1.msra.mxu0 %v266
        %365 = vmatprep.subr.mxu0 %v269
        %366 = vmatpush1.msra.mxu0 %v268
        %367 = vmatprep.subr.mxu0 %v271
        %368 = vmatpush1.msra.mxu0 %v270
        %369 = vmatprep.subr.mxu0 %v273
        %370 = vmatpush1.msra.mxu0 %v272
        %371 = vmatprep.subr.mxu0 %v275
        %372 = vmatpush1.msra.mxu0 %v274
        %373 = vmatprep.subr.mxu0 %v277
        %374 = vmatpush1.msra.mxu0 %v276
        %375 = vmatprep.subr.mxu0 %v279
        %376 = vmatpush1.msra.mxu0 %v278
        %377 = vmatprep.subr.mxu0 0.0
        %378 = vmatpush1.msra.mxu0 0.0
        %379 = vmatprep.subr.mxu0 0.0
        %380 = vmatpush1.msra.mxu0 0.0
        %381 = vmatprep.subr.mxu0 0.0
        %382 = vmatpush1.msra.mxu0 0.0
        %383 = vmatprep.subr.mxu0 0.0
        %384 = vmatpush1.msra.mxu0 0.0
        %385 = vmatprep.subr.mxu0 0.0
        %386 = vmatpush1.msra.mxu0 0.0
        %387 = vmatprep.subr.mxu0 0.0
        %388 = vmatpush1.msra.mxu0 0.0
        %389 = vmatprep.subr.mxu0 0.0
        %390 = vmatpush1.msra.mxu0 0.0
        %391 = vmatprep.subr.mxu0 0.0
        %392 = vmatpush1.msra.mxu0 0.0
        %393 = vmatprep.subr.mxu0 0.0
        %394 = vmatpush1.msra.mxu0 0.0
        %395 = vmatprep.subr.mxu0 0.0
        %396 = vmatpush1.msra.mxu0 0.0
        %397 = vmatprep.subr.mxu0 0.0
        %398 = vmatpush1.msra.mxu0 0.0
        %399 = vmatprep.subr.mxu0 0.0
        %400 = vmatpush1.msra.mxu0 0.0
        %401 = vmatprep.subr.mxu0 0.0
        %402 = vmatpush1.msra.mxu0 0.0
        %403 = vmatprep.subr.mxu0 0.0
        %404 = vmatpush1.msra.mxu0 0.0
        %405 = vmatprep.subr.mxu0 0.0
        %406 = vmatpush1.msra.mxu0 0.0
        %407 = vmatprep.subr.mxu0 0.0
        %408 = vmatpush1.msra.mxu0 0.0
        %409 = vmatprep.subr.mxu0 0.0
        %410 = vmatpush1.msra.mxu0 0.0
        %411 = vmatprep.subr.mxu0 0.0
        %412 = vmatpush1.msra.mxu0 0.0
        %413 = vmatprep.subr.mxu0 0.0
        %414 = vmatpush1.msra.mxu0 0.0
        %415 = vmatprep.subr.mxu0 0.0
        %416 = vmatpush1.msra.mxu0 0.0
        %417 = vmatprep.subr.mxu0 0.0
        %418 = vmatpush1.msra.mxu0 0.0
        %419 = vmatprep.subr.mxu0 0.0
        %420 = vmatpush1.msra.mxu0 0.0
        %421 = vmatprep.subr.mxu0 0.0
        %422 = vmatpush1.msra.mxu0 0.0
        %423 = vmatprep.subr.mxu0 0.0
        %424 = vmatpush1.msra.mxu0 0.0
        %425 = vmatprep.mubr.f32.mxu0 0.0
        %426 = vmatmul.mubr.f32.gmra.mrb[0].mxu0 %v338
        %v427 = vpop.f32.mrb[0].mxu0
        %v428 = vadd.f32 %v299, %v427
        %v429 = vpop.f32.mrb[0].mxu0
        %v430 = vadd.f32 %v299, %v429
        %431 = vmatprep.mubr.f32.mxu0 0.0
        %432 = vmatmul.mubr.f32.gmra.mrb[0].mxu0 %v341
        %v433 = vpop.f32.mrb[0].mxu0
        %v434 = vadd.f32 %v304, %v433
        %v435 = vpop.f32.mrb[0].mxu0
        %v436 = vadd.f32 %v304, %v435
        %437 = vmatprep.mubr.f32.mxu0 0.0
        %438 = vmatmul.mubr.f32.gmra.mrb[0].mxu0 %v344
        %v439 = vpop.f32.mrb[0].mxu0
        %v440 = vadd.f32 %v309, %v439
        %v441 = vpop.f32.mrb[0].mxu0
        %v442 = vadd.f32 %v309, %v441
        %443 = vmatprep.mubr.f32.mxu0 0.0
        %444 = vmatmul.mubr.f32.gmra.mrb[0].mxu0 %v347
        %v445 = vpop.f32.mrb[0].mxu0
        %v446 = vadd.f32 %v314, %v445
        %v447 = vpop.f32.mrb[0].mxu0
        %v448 = vadd.f32 %v314, %v447
        %449 = vmatprep.mubr.f32.mxu0 0.0
        %450 = vmatmul.mubr.f32.gmra.mrb[0].mxu0 %v350
        %v451 = vpop.f32.mrb[0].mxu0
        %v452 = vadd.f32 %v319, %v451
        %v453 = vpop.f32.mrb[0].mxu0
        %v454 = vadd.f32 %v319, %v453
        %455 = vmatprep.mubr.f32.mxu0 0.0
        %456 = vmatmul.mubr.f32.gmra.mrb[0].mxu0 %v353
        %v457 = vpop.f32.mrb[0].mxu0
        %v458 = vadd.f32 %v324, %v457
        %v459 = vpop.f32.mrb[0].mxu0
        %v460 = vadd.f32 %v324, %v459
        %461 = vmatprep.mubr.f32.mxu0 0.0
        %462 = vmatmul.mubr.f32.gmra.mrb[0].mxu0 %v356
        %v463 = vpop.f32.mrb[0].mxu0
        %v464 = vadd.f32 %v329, %v463
        %v465 = vpop.f32.mrb[0].mxu0
        %v466 = vadd.f32 %v329, %v465
        %467 = vmatprep.mubr.f32.mxu0 0.0
        %468 = vmatmul.mubr.f32.gmra.mrb[0].mxu0 %v359
        %v469 = vpop.f32.mrb[0].mxu0
        %v470 = vadd.f32 %v334, %v469
        %v471 = vpop.f32.mrb[0].mxu0
        %v472 = vadd.f32 %v334, %v471
        %473 = vdwg.mxu0
        %v474 = vmax.f32 %v428, 0.0
        %v475 = vmax.f32 %v430, 0.0
        %v476 = vmax.f32 %v434, 0.0
        %v477 = vmax.f32 %v436, 0.0
        %v478 = vmax.f32 %v440, 0.0
        %v479 = vmax.f32 %v442, 0.0
        %v480 = vmax.f32 %v446, 0.0
        %v481 = vmax.f32 %v448, 0.0
        %v482 = vmax.f32 %v452, 0.0
        %v483 = vmax.f32 %v454, 0.0
        %v484 = vmax.f32 %v458, 0.0
        %v485 = vmax.f32 %v460, 0.0
        %v486 = vmax.f32 %v464, 0.0
        %v487 = vmax.f32 %v466, 0.0
        %v488 = vmax.f32 %v470, 0.0
        %v489 = vmax.f32 %v472, 0.0
        %v490 = vld [vmem:[%s3] sm:$0x1]
        %s491 = sld [smem:[#allocation2]]
        %v492 = vstv %s491
        %v494 = vsel %vm336, %v490, 0
        %496 = vmatprep.subr.mxu0 %v475
        %497 = vmatpush1.msra.mxu0 %v474
        %498 = vmatprep.subr.mxu0 %v477
        %499 = vmatpush1.msra.mxu0 %v476
        %500 = vmatprep.subr.mxu0 %v479
        %501 = vmatpush1.msra.mxu0 %v478
        %502 = vmatprep.subr.mxu0 %v481
        %503 = vmatpush1.msra.mxu0 %v480
        %504 = vmatprep.subr.mxu0 %v483
        %505 = vmatpush1.msra.mxu0 %v482
        %506 = vmatprep.subr.mxu0 %v485
        %507 = vmatpush1.msra.mxu0 %v484
        %508 = vmatprep.subr.mxu0 %v487
        %509 = vmatpush1.msra.mxu0 %v486
        %510 = vmatprep.subr.mxu0 %v489
        %511 = vmatpush1.msra.mxu0 %v488
        %512 = vmatprep.subr.mxu0 0.0
        %513 = vmatpush1.msra.mxu0 0.0
        %514 = vmatprep.subr.mxu0 0.0
        %515 = vmatpush1.msra.mxu0 0.0
        %516 = vmatprep.subr.mxu0 0.0
        %517 = vmatpush1.msra.mxu0 0.0
        %518 = vmatprep.subr.mxu0 0.0
        %519 = vmatpush1.msra.mxu0 0.0
        %520 = vmatprep.subr.mxu0 0.0
        %521 = vmatpush1.msra.mxu0 0.0
        %522 = vmatprep.subr.mxu0 0.0
        %523 = vmatpush1.msra.mxu0 0.0
        %524 = vmatprep.subr.mxu0 0.0
        %525 = vmatpush1.msra.mxu0 0.0
        %526 = vmatprep.subr.mxu0 0.0
        %527 = vmatpush1.msra.mxu0 0.0
        %528 = vmatprep.subr.mxu0 0.0
        %529 = vmatpush1.msra.mxu0 0.0
        %530 = vmatprep.subr.mxu0 0.0
        %531 = vmatpush1.msra.mxu0 0.0
        %532 = vmatprep.subr.mxu0 0.0
        %533 = vmatpush1.msra.mxu0 0.0
        %534 = vmatprep.subr.mxu0 0.0
        %535 = vmatpush1.msra.mxu0 0.0
        %536 = vmatprep.subr.mxu0 0.0
        %537 = vmatpush1.msra.mxu0 0.0
        %538 = vmatprep.subr.mxu0 0.0
        %539 = vmatpush1.msra.mxu0 0.0
        %540 = vmatprep.subr.mxu0 0.0
        %541 = vmatpush1.msra.mxu0 0.0
        %542 = vmatprep.subr.mxu0 0.0
        %543 = vmatpush1.msra.mxu0 0.0
        %544 = vmatprep.subr.mxu0 0.0
        %545 = vmatpush1.msra.mxu0 0.0
        %546 = vmatprep.subr.mxu0 0.0
        %547 = vmatpush1.msra.mxu0 0.0
        %548 = vmatprep.subr.mxu0 0.0
        %549 = vmatpush1.msra.mxu0 0.0
        %550 = vmatprep.subr.mxu0 0.0
        %551 = vmatpush1.msra.mxu0 0.0
        %552 = vmatprep.subr.mxu0 0.0
        %553 = vmatpush1.msra.mxu0 0.0
        %554 = vmatprep.subr.mxu0 0.0
        %555 = vmatpush1.msra.mxu0 0.0
        %556 = vmatprep.subr.mxu0 0.0
        %557 = vmatpush1.msra.mxu0 0.0
        %558 = vmatprep.subr.mxu0 0.0
        %559 = vmatpush1.msra.mxu0 0.0
        %560 = vmatprep.mubr.f32.mxu0 0.0
        %561 = vmatmul.mubr.f32.gmra.mrb[0].mxu0 %v494
        %v562 = vpop.f32.mrb[0].mxu0
        %v563 = vadd.f32 %v492, %v562
        %v564 = vpop.f32.mrb[0].mxu0
        %v565 = vadd.f32 %v492, %v564
        %566 = vdwg.mxu0
        %v569 = vcombine.low %v563, %v565
        %v571 = vunpack.c.l.s4 1966171168
        %v572 = vunpack.c.0.s8 %v571
        %v573 = vlaneseq
        %v574 = vshrl.u32 %v573, 7
        %v575 = vsub.s32 %v572, %v574
        %v576 = vrot.slane %v569, %v575
        %v578 = vunpack.c.l.s4 1966171168
        %v579 = vunpack.c.0.s8 %v578
        %v580 = vlaneseq
        %v581 = vshrl.u32 %v580, 7
        %v582 = vsub.s32 %v579, %v581
        %v583 = vrot.slane %v576, %v582
        %v585 = vlaneseq
        %vm586 = vcmp.ge.s32.totalorder %v585, 0
        %vm587 = vcmp.lt.s32.totalorder %v585, 256
        %vm588 = vmand %vm586, %vm587
        %589 = vst.msk [vmem:[%s261] sm:$0x3] %vm588, %v583
        %s590 = sand.u32 %s157, 1
        %s591 = scalar_lea.sflag [#allocation5], %s590
        %s592 = sand.u32 %s157, 1
        %s593 = smul.addr %s592, 2
        %s594 = scalar_lea.vmem [#allocation6], %s593
        // Predicated region
        $region45: #{tpu_custom_call.1} parent=39 // pred_check
          %p595 = pneg %p167
        $region46: #{tpu_custom_call.1} parent=39 // pred_check_branch
          %597 = sbr.rel (%p595) target = $region48
        $region47: #{tpu_custom_call.1} parent=39 // pred_region
          %s598 = smul.u32 2, %s28
          %s600 = ssub.s32 32, 32
          %601 = vsyncadd %s591, %s600
          %s602 = smul.addr %s27, 2
          %s603 = sadd.s32 %s598, %s602
          %s604 = smul.addr %s603, 16
          %s605 = scalar_lea.hbm %s5, %s604
          %s607 = sshll.u32 %s594, 4
          %s608 = int_to_ptr.vmem [resolvable:$true] %s607
          %610 = dma.vmem_to_hbm [thread:$0]  %s608, 32, %s605, %s591
        $region48: #{tpu_custom_call.1} parent=39 // pred_fallthru
          _
      $region40: #{tpu_custom_call.1} parent=5 // pred_fallthru
        _
      %p611 = scmp.le.s32.totalorder 2, %s18
      // Predicated region
      $region49: #{tpu_custom_call.1} parent=5 // pred_check
        %p612 = pneg %p611
      $region50: #{tpu_custom_call.1} parent=5 // pred_check_branch
        %614 = sbr.rel (%p612) target = $region52
      $region51: #{tpu_custom_call.1} parent=5 // pred_region
        %s615 = ssub.s32 %s18, 2
        // Predicated region
        $region53: #{tpu_custom_call.1} parent=51 // pred_check
          %p616 = pneg %p173
        $region54: #{tpu_custom_call.1} parent=51 // pred_check_branch
          %618 = sbr.rel (%p616) target = $region56
        $region55: #{tpu_custom_call.1} parent=51 // pred_region
          %s619 = sand.u32 %s158, 1
          %s620 = scalar_lea.sflag [#allocation5], %s619
          %s621 = sand.u32 %s158, 1
          %s622 = smul.addr %s621, 2
          %s623 = scalar_lea.vmem [#allocation6], %s622
          %624 = dma.done %s620, 32
        $region56: #{tpu_custom_call.1} parent=51 // pred_fallthru
          _
      $region52: #{tpu_custom_call.1} parent=5 // pred_fallthru
        _
    $region6: #{tpu_custom_call.1} parent=1 // loop_footer
      %s22 = sadd.s32 1, %s18
    $region7: #{tpu_custom_call.1} parent=1 // loop_footer_branch
      %17 = sbr.rel target = $region3
    $region8: #{tpu_custom_call.1} parent=1 // loop_exit
      _
    %625 = vsyncpa [#allocation4], 1
    %s626 = scalar_lea.sflag [#allocation4], 1
    %627 = vsyncpa %s626, 1
    %628 = vsyncpa [#allocation5], 1
    %s629 = scalar_lea.sflag [#allocation5], 1
    %630 = vsyncpa %s629, 1

</llo_original>
